<compile_context>
chip_gen: v5e
topology: v5e:2x2
jax: 0.10.0
libtpu: 0.0.40
codegen_flags: <defaults>
</compile_context>

<pallas_src>
import numpy as np
import jax
import jax.numpy as jnp
from jax.experimental import pallas as pl
from jax.experimental.pallas import tpu as pltpu


def _apoe_kernel(s1_ref, s2_ref, out_ref):
    """s1_ref/s2_ref: VMEM bf16[R, 128] dosage tiles for rs7412 / rs429358.
    out_ref:         VMEM f32[R, 128] APOE score tile."""
    snp1 = 2.0 - s1_ref[...].astype(jnp.float32)
    snp2 = 2.0 - s2_ref[...].astype(jnp.float32)

    # NaN propagates from rs7412 only, matching the PyTorch reference.
    nan_mask = jnp.isnan(snp1)

    score = ((snp1 == 0.0) & (snp2 == 1.0)).astype(jnp.float32)
    score = score + ((snp1 == 1.0) & (snp2 == 1.0)).astype(jnp.float32)
    score = score + 2.0 * ((snp1 == 0.0) & (snp2 == 2.0)).astype(jnp.float32)

    out_ref[...] = jnp.where(nan_mask, jnp.float32(jnp.nan), score * 0.5)


def apoe_predict(snps: jax.Array, col_rs7412: int, col_rs429358: int,
                 *, lane_width: int = 128, max_block_rows: int = 4096) -> jax.Array:
    """APOE score for an (N, S) genotype dosage matrix.

    Returns float32 predictions of shape (N, 1, 1), matching evaluate_data().
    Only the two consumed columns are streamed through the Pallas kernel, as
    bf16 (rows, 128) slabs tiled sublane+lane dense over the sample axis.
    """
    N, S = snps.shape
    if not (0 <= col_rs7412 < S and 0 <= col_rs429358 < S):
        raise ValueError("SNP column index out of range")
    assert lane_width % 128 == 0, "lane width must be a multiple of 128"

    C = lane_width
    rows = -(-N // C)                 # ceil(N / C)
    pad = rows * C - N                # at most C - 1 samples of padding

    def col_as_slab(c):
        # strided column gather + bf16 cast + (tiny) pad + free reshape;
        # XLA fuses this chain into a single pass over the column.
        col = snps[:, c].astype(jnp.bfloat16)
        if pad:
            col = jnp.pad(col, (0, pad))
        return col.reshape(rows, C)

    s1 = col_as_slab(col_rs7412)      # (rows, 128) bf16
    s2 = col_as_slab(col_rs429358)    # (rows, 128) bf16

    # Row-block choice: full array when tiny; otherwise a multiple of 8 capped at
    # max_block_rows, sized so there are >=2 grid steps (both v7x TCs get work).
    if rows <= 8:
        r_blk = rows                  # full second-to-last dim -> always legal
    else:
        half = -(-rows // 2)
        r_blk = min(max_block_rows, ((half + 7) // 8) * 8)
    n_blocks = -(-rows // r_blk)      # ragged final block is masked by Pallas

    out2d = pl.pallas_call(
        _apoe_kernel,
        out_shape=jax.ShapeDtypeStruct((rows, C), jnp.float32),
        grid=(n_blocks,),
        in_specs=[pl.BlockSpec((r_blk, C), lambda i: (i, 0)),
                  pl.BlockSpec((r_blk, C), lambda i: (i, 0))],
        out_specs=pl.BlockSpec((r_blk, C), lambda i: (i, 0)),
        compiler_params=pltpu.CompilerParams(
            dimension_semantics=("parallel",),
            vmem_limit_bytes=32 * 1024 * 1024),
    )(s1, s2)

    flat = out2d.reshape(-1)
    if pad:
        flat = flat[:N]               # skipped entirely when N is lane-aligned
    return flat.reshape(-1, 1, 1)


def apoe_reference(snps: np.ndarray, c1: int, c2: int) -> np.ndarray:
    """Pure-numpy reference mirroring APOE.evaluate_data()."""
    snp1 = 2.0 - snps[:, c1:c1 + 1]
    snp2 = 2.0 - snps[:, c2:c2 + 1]
    nan_inx = np.isnan(snp1)
    apoe = ((snp1 == 0) & (snp2 == 1)) * 1.0
    apoe = apoe + ((snp1 == 1) & (snp2 == 1)) * 1.0
    apoe = apoe + ((snp1 == 0) & (snp2 == 2)) * 2.0
    apoe[nan_inx] = np.nan
    apoe = apoe / 2.0
    return apoe.reshape(-1, 1, 1).astype(np.float32)


if __name__ == "__main__":
    key = jax.random.PRNGKey(0)
    N, S = 1000, 32                    # 1000 samples (not lane-aligned), 32 SNPs
    COL_RS7412, COL_RS429358 = 2, 5    # synthetic positions of the two SNPs

    # Deterministic dummy stand-in for the module's unused `self._ = nn.Linear(1,1)`.
    k_lin, k_snp = jax.random.split(key)
    _dummy_linear_w = jax.random.normal(k_lin, (1, 1), jnp.float32)  # unused, as in the module

    # Synthetic genotype dosages in {0,1,2}, with NaNs to exercise the NaN paths.
    snps = jax.random.randint(k_snp, (N, S), 0, 3).astype(jnp.float32)
    snps = snps.at[3, COL_RS7412].set(jnp.nan)     # NaN in rs7412 -> NaN score
    snps = snps.at[7, COL_RS429358].set(jnp.nan)   # NaN in rs429358 -> 0.0 (matches reference)

    predicts = apoe_predict(snps, COL_RS7412, COL_RS429358)
    predicts = jax.block_until_ready(predicts)

    ref = apoe_reference(np.asarray(snps), COL_RS7412, COL_RS429358)
    assert predicts.shape == (N, 1, 1)
    assert np.allclose(np.asarray(predicts), ref, equal_nan=True), "mismatch vs reference"

    # TODO(synk): file-based pieces of __init__ (pd.read_csv eQTL table, read_plink
    # .bed) and forward() (raises NotImplementedError) have no kernel equivalent
    # and are intentionally replaced by synthetic column indices.
    print("KERNEL_OK")
</pallas_src>

<mosaic_0001>
module attributes {stable_mosaic.version = 11 : i64} {
  func.func @_apoe_kernel(%arg0: i32, %arg1: memref<8x128xbf16, #tpu.memory_space<vmem>>, %arg2: memref<8x128xbf16, #tpu.memory_space<vmem>>, %arg3: memref<8x128xf32, #tpu.memory_space<vmem>>) attributes {dimension_semantics = [#tpu.dimension_semantics<parallel>], iteration_bounds = array<i64: 1>, scalar_prefetch = 0 : i64, scratch_operands = 0 : i64, tpu.core_type = #tpu.core_type<tc>, window_params = [{transform_indices = @transform_0, window_bounds = array<i64: 8, 128>}, {transform_indices = @transform_1, window_bounds = array<i64: 8, 128>}, {transform_indices = @transform_2, window_bounds = array<i64: 8, 128>}]} {
    %c0 = arith.constant 0 : index
    %c0_0 = arith.constant 0 : index
    %0 = vector.load %arg1[%c0, %c0_0] : memref<8x128xbf16, #tpu.memory_space<vmem>>, vector<8x128xbf16>
    %1 = arith.extf %0 : vector<8x128xbf16> to vector<8x128xf32>
    %cst = arith.constant 2.000000e+00 : f32
    %2 = vector.broadcast %cst : f32 to vector<8x128xf32>
    %3 = arith.subf %2, %1 : vector<8x128xf32>
    %c0_1 = arith.constant 0 : index
    %c0_2 = arith.constant 0 : index
    %4 = vector.load %arg2[%c0_1, %c0_2] : memref<8x128xbf16, #tpu.memory_space<vmem>>, vector<8x128xbf16>
    %5 = arith.extf %4 : vector<8x128xbf16> to vector<8x128xf32>
    %cst_3 = arith.constant 2.000000e+00 : f32
    %6 = vector.broadcast %cst_3 : f32 to vector<8x128xf32>
    %7 = arith.subf %6, %5 : vector<8x128xf32>
    %8 = arith.cmpf one, %3, %3 : vector<8x128xf32>
    %cst_4 = arith.constant 0.000000e+00 : f32
    %9 = vector.broadcast %cst_4 : f32 to vector<8x128xf32>
    %10 = arith.cmpf oeq, %3, %9 : vector<8x128xf32>
    %cst_5 = arith.constant 1.000000e+00 : f32
    %11 = vector.broadcast %cst_5 : f32 to vector<8x128xf32>
    %12 = arith.cmpf oeq, %7, %11 : vector<8x128xf32>
    %13 = arith.andi %10, %12 : vector<8x128xi1>
    %14 = arith.extui %13 : vector<8x128xi1> to vector<8x128xi32>
    %15 = arith.sitofp %14 : vector<8x128xi32> to vector<8x128xf32>
    %cst_6 = arith.constant 1.000000e+00 : f32
    %16 = vector.broadcast %cst_6 : f32 to vector<8x128xf32>
    %17 = arith.cmpf oeq, %3, %16 : vector<8x128xf32>
    %cst_7 = arith.constant 1.000000e+00 : f32
    %18 = vector.broadcast %cst_7 : f32 to vector<8x128xf32>
    %19 = arith.cmpf oeq, %7, %18 : vector<8x128xf32>
    %20 = arith.andi %17, %19 : vector<8x128xi1>
    %21 = arith.extui %20 : vector<8x128xi1> to vector<8x128xi32>
    %22 = arith.sitofp %21 : vector<8x128xi32> to vector<8x128xf32>
    %23 = arith.addf %15, %22 : vector<8x128xf32>
    %cst_8 = arith.constant 0.000000e+00 : f32
    %24 = vector.broadcast %cst_8 : f32 to vector<8x128xf32>
    %25 = arith.cmpf oeq, %3, %24 : vector<8x128xf32>
    %cst_9 = arith.constant 2.000000e+00 : f32
    %26 = vector.broadcast %cst_9 : f32 to vector<8x128xf32>
    %27 = arith.cmpf oeq, %7, %26 : vector<8x128xf32>
    %28 = arith.andi %25, %27 : vector<8x128xi1>
    %29 = arith.extui %28 : vector<8x128xi1> to vector<8x128xi32>
    %30 = arith.sitofp %29 : vector<8x128xi32> to vector<8x128xf32>
    %cst_10 = arith.constant 2.000000e+00 : f32
    %31 = vector.broadcast %cst_10 : f32 to vector<8x128xf32>
    %32 = arith.mulf %31, %30 : vector<8x128xf32>
    %33 = arith.addf %23, %32 : vector<8x128xf32>
    %cst_11 = arith.constant 5.000000e-01 : f32
    %34 = vector.broadcast %cst_11 : f32 to vector<8x128xf32>
    %35 = arith.mulf %33, %34 : vector<8x128xf32>
    %cst_12 = arith.constant 0x7FC00000 : f32
    %36 = vector.broadcast %cst_12 : f32 to vector<8x128xf32>
    %37 = arith.select %8, %36, %35 : vector<8x128xi1>, vector<8x128xf32>
    %c0_13 = arith.constant 0 : index
    %c0_14 = arith.constant 0 : index
    %38 = vector.load %arg3[%c0_13, %c0_14] : memref<8x128xf32, #tpu.memory_space<vmem>>, vector<8x128xf32>
    tpu.vector_store %arg3[%c0_13, %c0_14], %37 {strides = array<i32>} : memref<8x128xf32, #tpu.memory_space<vmem>>, vector<8x128xf32>,
    return
  }
  func.func @transform_0(%arg0: i32) -> (i32, i32) {
    %c0_i32 = arith.constant 0 : i32
    %c0_i32_0 = arith.constant 0 : i32
    return %arg0, %c0_i32 : i32, i32
  }
  func.func @transform_1(%arg0: i32) -> (i32, i32) {
    %c0_i32 = arith.constant 0 : i32
    %c0_i32_0 = arith.constant 0 : i32
    return %arg0, %c0_i32 : i32, i32
  }
  func.func @transform_2(%arg0: i32) -> (i32, i32) {
    %c0_i32 = arith.constant 0 : i32
    %c0_i32_0 = arith.constant 0 : i32
    return %arg0, %c0_i32 : i32, i32
  }
}

</mosaic_0001>

<llo_original>
// kernel: tpu_custom_call.1
$region0: #{tpu_custom_call.1}
  #allocation0 [shape = 'u32[]', space=smem, size = 0x4, offset = 0x4, fixed_abs, tag = 'smem constant byte address 0x4 - core index']
  #allocation1 [shape = 'u32[72,128]{1,0:T(1,128)}', space=vmem, size = 0x9000, scoped, tag = 'internal scratch']
  %s0 = inlined_call_operand.hbm [shape: bf16[8,128], index: 0, kind: input, shape index: {}]
  %s1 = inlined_call_operand.hbm [shape: bf16[8,128], index: 1, kind: input, shape index: {}]
  %s2 = inlined_call_operand.hbm [shape: f32[8,128], index: 2, kind: output, shape index: {}]
  %s3 = sld [smem:[#allocation0]]
  $region26: #{tpu_custom_call.1} parent=0
    _
  %s5 = ssub.s32 1, %s3
  %s6 = scalar_select 0, %s5, %s3
  $region1: #{tpu_custom_call.1} parent=0
    #allocation2 [shape = 'u8[2048]{0}', space=vmem, size = 0x800, scoped, tag = 'input window, operand 0, single buffered']
    #allocation3 [shape = 's32[1]{0}', space=sflag, size = 0x4, scoped, tag = 'scoped memory for tpu_custom_call.1']
    #allocation4 [shape = 's32[1]{0}', space=sflag, size = 0x4, scoped, tag = 'scoped memory for tpu_custom_call.1']
    #allocation5 [shape = 'u8[2048]{0}', space=vmem, size = 0x800, scoped, tag = 'input window, operand 1, single buffered']
    #allocation6 [shape = 's32[1]{0}', space=sflag, size = 0x4, scoped, tag = 'scoped memory for tpu_custom_call.1']
    #allocation7 [shape = 'u8[4096]{0}', space=vmem, size = 0x1000, scoped, tag = 'output window, operand 0, single buffered']
    %7 = vsyncpa [#allocation3], 0
    %8 = vsyncpa [#allocation6], 0
    %9 = vsyncpa [#allocation4], 0
    // Predicated region
    $region2: #{tpu_custom_call.1} parent=1 // pred_check
      _
    $region3: #{tpu_custom_call.1} parent=1 // pred_check_branch
      %11 = sbr.rel (0) target = $region5
    $region4: #{tpu_custom_call.1} parent=1 // pred_region
      %13 = vsyncadd [#allocation3], 0
      %s15 = sshll.u32 %s0, 4
      %s16 = int_to_ptr.hbm [resolvable:$true] %s15
      %s17 = sshll.u32 [#allocation2], 4
      %s18 = int_to_ptr.vmem [resolvable:$true] %s17
      %20 = dma.hbm_to_vmem [thread:$0]  %s16, 64, %s18, [#allocation3]
    $region5: #{tpu_custom_call.1} parent=1 // pred_fallthru
      _
    // Predicated region
    $region6: #{tpu_custom_call.1} parent=1 // pred_check
      _
    $region7: #{tpu_custom_call.1} parent=1 // pred_check_branch
      %22 = sbr.rel (0) target = $region9
    $region8: #{tpu_custom_call.1} parent=1 // pred_region
      %24 = vsyncadd [#allocation6], 0
      %s26 = sshll.u32 %s1, 4
      %s27 = int_to_ptr.hbm [resolvable:$true] %s26
      %s28 = sshll.u32 [#allocation5], 4
      %s29 = int_to_ptr.vmem [resolvable:$true] %s28
      %31 = dma.hbm_to_vmem [thread:$0]  %s27, 64, %s29, [#allocation6]
    $region9: #{tpu_custom_call.1} parent=1 // pred_fallthru
      _
    // Predicated region
    $region10: #{tpu_custom_call.1} parent=1 // pred_check
      _
    $region11: #{tpu_custom_call.1} parent=1 // pred_check_branch
      %33 = sbr.rel (0) target = $region13
    $region12: #{tpu_custom_call.1} parent=1 // pred_region
      %35 = dma.done [#allocation3], 64
    $region13: #{tpu_custom_call.1} parent=1 // pred_fallthru
      _
    // Predicated region
    $region14: #{tpu_custom_call.1} parent=1 // pred_check
      _
    $region15: #{tpu_custom_call.1} parent=1 // pred_check_branch
      %37 = sbr.rel (0) target = $region17
    $region16: #{tpu_custom_call.1} parent=1 // pred_region
      %39 = dma.done [#allocation6], 64
    $region17: #{tpu_custom_call.1} parent=1 // pred_fallthru
      _
    %v40 = vld [vmem:[#allocation2] sm:$0xf]
    %v41 = vunpack.c.l.bf16 %v40
    %v42 = vsub.f32 2.0, %v41
    %v43 = vld [vmem:[#allocation5] sm:$0xf]
    %v44 = vunpack.c.l.bf16 %v43
    %v45 = vsub.f32 2.0, %v44
    %vm46 = vcmp.ne.f32.partialorder %v42, %v42
    %vm47 = vcmp.eq.f32.partialorder %v42, 0.0
    %vm48 = vcmp.eq.f32.partialorder %v45, 1.0
    %vm49 = vmand %vm47, %vm48
    %v50 = vsel %vm49, 1, 0
    %v51 = vcvt.s32.f32 %v50
    %vm52 = vcmp.eq.f32.partialorder %v42, 1.0
    %vm53 = vmand %vm52, %vm48
    %v54 = vsel %vm53, 1, 0
    %v55 = vcvt.s32.f32 %v54
    %v56 = vadd.f32 %v51, %v55
    %vm57 = vcmp.eq.f32.partialorder %v45, 2.0
    %vm58 = vmand %vm47, %vm57
    %v59 = vsel %vm58, 1, 0
    %v60 = vcvt.s32.f32 %v59
    %v61 = vmul.f32 %v60, 2.0
    %v62 = vadd.f32 %v56, %v61
    %v63 = vmul.f32 %v62, 0.5
    %v64 = vsel %vm46, nan, %v63
    %65 = vst [vmem:[#allocation7] sm:$0xff] %v64
    // Predicated region
    $region18: #{tpu_custom_call.1} parent=1 // pred_check
      _
    $region19: #{tpu_custom_call.1} parent=1 // pred_check_branch
      %67 = sbr.rel (0) target = $region21
    $region20: #{tpu_custom_call.1} parent=1 // pred_region
      %69 = vsyncadd [#allocation4], 0
      %s71 = sshll.u32 [#allocation7], 4
      %s72 = int_to_ptr.vmem [resolvable:$true] %s71
      %s73 = sshll.u32 %s2, 4
      %s74 = int_to_ptr.hbm [resolvable:$true] %s73
      %76 = dma.vmem_to_hbm [thread:$0]  %s72, 128, %s74, [#allocation4]
    $region21: #{tpu_custom_call.1} parent=1 // pred_fallthru
      _
    // Predicated region
    $region22: #{tpu_custom_call.1} parent=1 // pred_check
      _
    $region23: #{tpu_custom_call.1} parent=1 // pred_check_branch
      %78 = sbr.rel (0) target = $region25
    $region24: #{tpu_custom_call.1} parent=1 // pred_region
      %80 = dma.done [#allocation4], 128
    $region25: #{tpu_custom_call.1} parent=1 // pred_fallthru
      _
    %81 = vsyncpa [#allocation3], 1
    %82 = vsyncpa [#allocation6], 1
    %83 = vsyncpa [#allocation4], 1

</llo_original>
